<compile_context>
chip_gen: v6e
topology: v6e:2x2x1
jax: 0.10.0
libtpu: 0.0.40
codegen_flags: <defaults>
</compile_context>

<pallas_src>
import functools

import jax
import jax.numpy as jnp
from jax.experimental import pallas as pl
from jax.experimental.pallas import tpu as pltpu


# ---------------------------------------------------------------------------
# Kernels
# ---------------------------------------------------------------------------
def _small_fused_kernel(x1_ref, x2_ref, x3_ref, x4_ref, inp_ref, o_ref):
    # One grid point: MXU matmul fused with three elementwise adds.
    v1 = jnp.dot(x1_ref[...], x2_ref[...], preferred_element_type=jnp.float32)
    o_ref[...] = (v1 + x3_ref[...] + x4_ref[...] + inp_ref[...]).astype(o_ref.dtype)


def _tiled_fused_kernel(x1_ref, x2_ref, x3_ref, x4_ref, inp_ref, o_ref, acc_ref):
    k = pl.program_id(2)

    @pl.when(k == 0)
    def _():
        acc_ref[...] = jnp.zeros_like(acc_ref)

    acc_ref[...] += jnp.dot(
        x1_ref[...], x2_ref[...], preferred_element_type=jnp.float32
    )

    # Epilogue: adds ride only on the last K step (off the K-loop critical path).
    @pl.when(k == pl.num_programs(2) - 1)
    def _():
        o_ref[...] = (
            acc_ref[...] + x3_ref[...] + x4_ref[...] + inp_ref[...]
        ).astype(o_ref.dtype)


# ---------------------------------------------------------------------------
# Wrapper
# ---------------------------------------------------------------------------
@functools.partial(jax.jit, static_argnames=("tm", "tn", "tk"))
def fused_mm_add(x1, x2, x3, x4, inp, *, tm=256, tn=256, tk=512):
    M, K = x1.shape
    K2, N = x2.shape
    assert K == K2, "inner dimensions must match"
    out_shape = jax.ShapeDtypeStruct((M, N), jnp.float32)

    # Cap tiles to the problem size.
    tm_, tn_, tk_ = min(tm, M), min(tn, N), min(tk, K)

    tiled_ok = (
        M % tm_ == 0 and N % tn_ == 0 and K % tk_ == 0
        and tm_ % 8 == 0 and tn_ % 128 == 0 and tk_ % 128 == 0
    )

    if not tiled_ok:
        # Tiny / irregular problem (e.g. the 3x3 spec case): one grid point,
        # full-array blocks (block_shape == array dims is always legal).
        full = lambda shape: pl.BlockSpec(shape, lambda: (0, 0))
        return pl.pallas_call(
            _small_fused_kernel,
            out_shape=out_shape,
            in_specs=[
                full((M, K)),
                full((K, N)),
                full((M, N)),
                full((M, N)),
                full((M, N)),
            ],
            out_specs=full((M, N)),
        )(x1, x2, x3, x4, inp)

    grid = (M // tm_, N // tn_, K // tk_)
    return pl.pallas_call(
        _tiled_fused_kernel,
        out_shape=out_shape,
        grid=grid,
        in_specs=[
            pl.BlockSpec((tm_, tk_), lambda i, j, k: (i, k)),   # x1
            pl.BlockSpec((tk_, tn_), lambda i, j, k: (k, j)),   # x2
            pl.BlockSpec((tm_, tn_), lambda i, j, k: (i, j)),   # x3 (k-invariant)
            pl.BlockSpec((tm_, tn_), lambda i, j, k: (i, j)),   # x4 (k-invariant)
            pl.BlockSpec((tm_, tn_), lambda i, j, k: (i, j)),   # inp (k-invariant)
        ],
        out_specs=pl.BlockSpec((tm_, tn_), lambda i, j, k: (i, j)),
        scratch_shapes=[pltpu.VMEM((tm_, tn_), jnp.float32)],
        compiler_params=pltpu.CompilerParams(
            dimension_semantics=("parallel", "parallel", "arbitrary")
        ),
    )(x1, x2, x3, x4, inp)
    # TODO(synk): optionally cast x1/x2 to bfloat16 (keeping f32 accumulation)
    # for ~2-3x MXU throughput when the caller tolerates bf16 inputs.


# ---------------------------------------------------------------------------
# Self-test
# ---------------------------------------------------------------------------
if __name__ == "__main__":
    key = jax.random.PRNGKey(0)

    # 1) Spec-sized case (3x3), exercises the small-shape path.
    k1, k2, k3, k4, k5, key = jax.random.split(key, 6)
    x1 = jax.random.normal(k1, (3, 3), dtype=jnp.float32)
    x2 = jax.random.normal(k2, (3, 3), dtype=jnp.float32)
    x3 = jax.random.normal(k3, (3, 3), dtype=jnp.float32)
    x4 = jax.random.normal(k4, (3, 3), dtype=jnp.float32)
    inp = jax.random.normal(k5, (3, 3), dtype=jnp.float32)

    out_small = fused_mm_add(x1, x2, x3, x4, inp)
    jax.block_until_ready(out_small)
    ref_small = jnp.dot(x1, x2) + x3 + x4 + inp
    assert jnp.allclose(out_small, ref_small, atol=1e-4, rtol=1e-4), \
        "small-path mismatch vs reference"

    # 2) Larger case (512x512), exercises the tiled 3-D grid + accumulator path.
    k1, k2, k3, k4, k5, key = jax.random.split(key, 6)
    M = N = K = 512
    X1 = jax.random.normal(k1, (M, K), dtype=jnp.float32)
    X2 = jax.random.normal(k2, (K, N), dtype=jnp.float32)
    X3 = jax.random.normal(k3, (M, N), dtype=jnp.float32)
    X4 = jax.random.normal(k4, (M, N), dtype=jnp.float32)
    INP = jax.random.normal(k5, (M, N), dtype=jnp.float32)

    out_big = fused_mm_add(X1, X2, X3, X4, INP)
    jax.block_until_ready(out_big)
    ref_big = jnp.dot(X1, X2, preferred_element_type=jnp.float32) + X3 + X4 + INP
    assert jnp.allclose(out_big, ref_big, atol=1e-2, rtol=1e-2), \
        "tiled-path mismatch vs reference"

    print("KERNEL_OK")
</pallas_src>

<mosaic_0001>
module attributes {stable_mosaic.version = 11 : i64} {
  func.func @_small_fused_kernel(%arg0: memref<3x3xf32, #tpu.memory_space<vmem>>, %arg1: memref<3x3xf32, #tpu.memory_space<vmem>>, %arg2: memref<3x3xf32, #tpu.memory_space<vmem>>, %arg3: memref<3x3xf32, #tpu.memory_space<vmem>>, %arg4: memref<3x3xf32, #tpu.memory_space<vmem>>, %arg5: memref<3x3xf32, #tpu.memory_space<vmem>>) attributes {dimension_semantics = [], scalar_prefetch = 0 : i64, scratch_operands = 0 : i64, tpu.core_type = #tpu.core_type<tc>} {
    %c0 = arith.constant 0 : index
    %c0_0 = arith.constant 0 : index
    %0 = vector.load %arg0[%c0, %c0_0] : memref<3x3xf32, #tpu.memory_space<vmem>>, vector<3x3xf32>
    %c0_1 = arith.constant 0 : index
    %c0_2 = arith.constant 0 : index
    %1 = vector.load %arg1[%c0_1, %c0_2] : memref<3x3xf32, #tpu.memory_space<vmem>>, vector<3x3xf32>
    %cst = arith.constant dense<0.000000e+00> : vector<3x3xf32>
    %2 = tpu.matmul %0, %1, %cst {dimension_numbers = #tpu.dot_dimension_numbers<[1], [0], [0], [1], [0, 0, 1, 1], [], []>} : vector<3x3xf32>, vector<3x3xf32>, vector<3x3xf32> -> vector<3x3xf32>
    %c0_3 = arith.constant 0 : index
    %c0_4 = arith.constant 0 : index
    %3 = vector.load %arg2[%c0_3, %c0_4] : memref<3x3xf32, #tpu.memory_space<vmem>>, vector<3x3xf32>
    %4 = arith.addf %2, %3 : vector<3x3xf32>
    %c0_5 = arith.constant 0 : index
    %c0_6 = arith.constant 0 : index
    %5 = vector.load %arg3[%c0_5, %c0_6] : memref<3x3xf32, #tpu.memory_space<vmem>>, vector<3x3xf32>
    %6 = arith.addf %4, %5 : vector<3x3xf32>
    %c0_7 = arith.constant 0 : index
    %c0_8 = arith.constant 0 : index
    %7 = vector.load %arg4[%c0_7, %c0_8] : memref<3x3xf32, #tpu.memory_space<vmem>>, vector<3x3xf32>
    %8 = arith.addf %6, %7 : vector<3x3xf32>
    %c0_9 = arith.constant 0 : index
    %c0_10 = arith.constant 0 : index
    %9 = vector.load %arg5[%c0_9, %c0_10] : memref<3x3xf32, #tpu.memory_space<vmem>>, vector<3x3xf32>
    tpu.vector_store %arg5[%c0_9, %c0_10], %8 {strides = array<i32>} : memref<3x3xf32, #tpu.memory_space<vmem>>, vector<3x3xf32>,
    return
  }
}

</mosaic_0001>

<llo_original>
// kernel: fused_mm_add.1
$region0: #{fused_mm_add.1}
  #allocation0 [shape = 'u32[]', space=smem, size = 0x4, offset = 0x4, fixed_abs, tag = 'smem constant byte address 0x4 - core index']
  #allocation1 [shape = 'u32[144,128]{1,0:T(1,128)}', space=vmem, size = 0x12000, scoped, tag = 'internal scratch']
  %s0 = inlined_call_operand.hbm [shape: f32[3,3], index: 0, kind: input, shape index: {}]
  %s1 = inlined_call_operand.hbm [shape: f32[3,3], index: 1, kind: input, shape index: {}]
  %s2 = inlined_call_operand.hbm [shape: f32[3,3], index: 2, kind: input, shape index: {}]
  %s3 = inlined_call_operand.vmem [shape: f32[3,3], index: 3, kind: input, shape index: {}]
  %s4 = inlined_call_operand.hbm [shape: f32[3,3], index: 4, kind: input, shape index: {}]
  %s5 = inlined_call_operand.hbm [shape: f32[3,3], index: 5, kind: output, shape index: {}]
  %s6 = sld [smem:[#allocation0]]
  $region46: #{fused_mm_add.1} parent=0
    _
  %s8 = ssub.s32 1, %s6
  %s9 = scalar_select 0, %s8, %s6
  $region1: #{fused_mm_add.1} parent=0
    #allocation2 [shape = 'u8[2048]{0}', space=vmem, size = 0x800, scoped, tag = 'input window, operand 0, single buffered']
    #allocation3 [shape = 's32[1]{0}', space=sflag, size = 0x4, scoped, tag = 'scoped memory for fused_mm_add.1']
    #allocation4 [shape = 's32[1]{0}', space=sflag, size = 0x4, scoped, tag = 'scoped memory for fused_mm_add.1']
    #allocation5 [shape = 'u8[2048]{0}', space=vmem, size = 0x800, scoped, tag = 'input window, operand 1, single buffered']
    #allocation6 [shape = 's32[1]{0}', space=sflag, size = 0x4, scoped, tag = 'scoped memory for fused_mm_add.1']
    #allocation7 [shape = 'u8[2048]{0}', space=vmem, size = 0x800, scoped, tag = 'input window, operand 2, single buffered']
    #allocation8 [shape = 'u8[2048]{0}', space=vmem, size = 0x800, scoped, tag = 'input window, operand 4, single buffered']
    #allocation9 [shape = 's32[1]{0}', space=sflag, size = 0x4, scoped, tag = 'scoped memory for fused_mm_add.1']
    #allocation10 [shape = 'u8[2048]{0}', space=vmem, size = 0x800, scoped, tag = 'output window, operand 0, single buffered']
    %10 = vsyncpa [#allocation3], 0
    %11 = vsyncpa [#allocation6], 0
    %12 = vsyncpa [#allocation9], 0
    %13 = vsyncpa [#allocation4], 0
    // Predicated region
    $region2: #{fused_mm_add.1} parent=1 // pred_check
      _
    $region3: #{fused_mm_add.1} parent=1 // pred_check_branch
      %15 = sbr.rel (0) target = $region5
    $region4: #{fused_mm_add.1} parent=1 // pred_region
      %s17 = ssub.s32 64, 64
      %18 = vsyncadd [#allocation3], %s17
      %s20 = sshll.u32 [#allocation2], 4
      %s21 = int_to_ptr.vmem [resolvable:$true] %s20
      %23 = dma.hbm_to_vmem [thread:$0]  %s0, 64, %s21, [#allocation3]
    $region5: #{fused_mm_add.1} parent=1 // pred_fallthru
      _
    // Predicated region
    $region6: #{fused_mm_add.1} parent=1 // pred_check
      _
    $region7: #{fused_mm_add.1} parent=1 // pred_check_branch
      %25 = sbr.rel (0) target = $region9
    $region8: #{fused_mm_add.1} parent=1 // pred_region
      %s27 = ssub.s32 64, 64
      %28 = vsyncadd [#allocation6], %s27
      %s30 = sshll.u32 [#allocation5], 4
      %s31 = int_to_ptr.vmem [resolvable:$true] %s30
      %33 = dma.hbm_to_vmem [thread:$0]  %s1, 64, %s31, [#allocation6]
    $region9: #{fused_mm_add.1} parent=1 // pred_fallthru
      _
    // Predicated region
    $region10: #{fused_mm_add.1} parent=1 // pred_check
      _
    $region11: #{fused_mm_add.1} parent=1 // pred_check_branch
      %35 = sbr.rel (0) target = $region13
    $region12: #{fused_mm_add.1} parent=1 // pred_region
      %s37 = ssub.s32 64, 64
      %38 = vsyncadd [#allocation6], %s37
      %s40 = sshll.u32 [#allocation7], 4
      %s41 = int_to_ptr.vmem [resolvable:$true] %s40
      %43 = dma.hbm_to_vmem [thread:$0]  %s2, 64, %s41, [#allocation6]
    $region13: #{fused_mm_add.1} parent=1 // pred_fallthru
      _
    // Predicated region
    $region14: #{fused_mm_add.1} parent=1 // pred_check
      _
    $region15: #{fused_mm_add.1} parent=1 // pred_check_branch
      %45 = sbr.rel (0) target = $region17
    $region16: #{fused_mm_add.1} parent=1 // pred_region
      _
    $region17: #{fused_mm_add.1} parent=1 // pred_fallthru
      _
    // Predicated region
    $region18: #{fused_mm_add.1} parent=1 // pred_check
      _
    $region19: #{fused_mm_add.1} parent=1 // pred_check_branch
      %47 = sbr.rel (0) target = $region21
    $region20: #{fused_mm_add.1} parent=1 // pred_region
      %s49 = ssub.s32 64, 64
      %50 = vsyncadd [#allocation9], %s49
      %s52 = sshll.u32 [#allocation8], 4
      %s53 = int_to_ptr.vmem [resolvable:$true] %s52
      %55 = dma.hbm_to_vmem [thread:$0]  %s4, 64, %s53, [#allocation9]
    $region21: #{fused_mm_add.1} parent=1 // pred_fallthru
      _
    // Predicated region
    $region22: #{fused_mm_add.1} parent=1 // pred_check
      _
    $region23: #{fused_mm_add.1} parent=1 // pred_check_branch
      %57 = sbr.rel (0) target = $region25
    $region24: #{fused_mm_add.1} parent=1 // pred_region
      %58 = dma.done [#allocation3], 64
    $region25: #{fused_mm_add.1} parent=1 // pred_fallthru
      _
    // Predicated region
    $region26: #{fused_mm_add.1} parent=1 // pred_check
      _
    $region27: #{fused_mm_add.1} parent=1 // pred_check_branch
      %60 = sbr.rel (0) target = $region29
    $region28: #{fused_mm_add.1} parent=1 // pred_region
      %61 = dma.done [#allocation6], 64
    $region29: #{fused_mm_add.1} parent=1 // pred_fallthru
      _
    // Predicated region
    $region30: #{fused_mm_add.1} parent=1 // pred_check
      _
    $region31: #{fused_mm_add.1} parent=1 // pred_check_branch
      %63 = sbr.rel (0) target = $region33
    $region32: #{fused_mm_add.1} parent=1 // pred_region
      %64 = dma.done [#allocation6], 64
    $region33: #{fused_mm_add.1} parent=1 // pred_fallthru
      _
    // Predicated region
    $region34: #{fused_mm_add.1} parent=1 // pred_check
      _
    $region35: #{fused_mm_add.1} parent=1 // pred_check_branch
      %66 = sbr.rel (0) target = $region37
    $region36: #{fused_mm_add.1} parent=1 // pred_region
      %67 = dma.done [#allocation9], 64
    $region37: #{fused_mm_add.1} parent=1 // pred_fallthru
      _
    %v68 = vld [vmem:[#allocation2] sm:$0x7]
    %v69 = vld [vmem:[#allocation5] sm:$0x7]
    %v70 = vld [vmem:[#allocation7] sm:$0x7]
    %vm71 = vcmask 23552
    %v73 = vsel %vm71, %v68, 0
    %vm75 = vcmask 1042432
    %v77 = vsel %vm75, %v69, 0
    %79 = vmatprep.subr.mxu0 0.0
    %80 = vmatpush1.msra.mxu0 0.0
    %81 = vmatprep.subr.mxu0 0.0
    %82 = vmatpush1.msra.mxu0 0.0
    %83 = vmatprep.subr.mxu0 0.0
    %84 = vmatpush1.msra.mxu0 0.0
    %85 = vmatprep.subr.mxu0 0.0
    %86 = vmatpush1.msra.mxu0 0.0
    %87 = vmatprep.subr.mxu0 0.0
    %88 = vmatpush1.msra.mxu0 0.0
    %89 = vmatprep.subr.mxu0 0.0
    %90 = vmatpush1.msra.mxu0 0.0
    %91 = vmatprep.subr.mxu0 0.0
    %92 = vmatpush1.msra.mxu0 0.0
    %93 = vmatprep.subr.mxu0 0.0
    %94 = vmatpush1.msra.mxu0 0.0
    %95 = vmatprep.subr.mxu0 0.0
    %96 = vmatpush1.msra.mxu0 0.0
    %97 = vmatprep.subr.mxu0 0.0
    %98 = vmatpush1.msra.mxu0 0.0
    %99 = vmatprep.subr.mxu0 0.0
    %100 = vmatpush1.msra.mxu0 0.0
    %101 = vmatprep.subr.mxu0 0.0
    %102 = vmatpush1.msra.mxu0 0.0
    %103 = vmatprep.subr.mxu0 0.0
    %104 = vmatpush1.msra.mxu0 0.0
    %105 = vmatprep.subr.mxu0 0.0
    %106 = vmatpush1.msra.mxu0 0.0
    %107 = vmatprep.subr.mxu0 0.0
    %108 = vmatpush1.msra.mxu0 0.0
    %109 = vmatprep.subr.mxu0 0.0
    %110 = vmatpush1.msra.mxu0 %v77
    %111 = vmatprep.subr.mxu0 0.0
    %112 = vmatpush2.msra.mxu0 0.0
    %113 = vmatprep.subr.mxu0 0.0
    %114 = vmatpush2.msra.mxu0 0.0
    %115 = vmatprep.subr.mxu0 0.0
    %116 = vmatpush2.msra.mxu0 0.0
    %117 = vmatprep.subr.mxu0 0.0
    %118 = vmatpush2.msra.mxu0 0.0
    %119 = vmatprep.subr.mxu0 0.0
    %120 = vmatpush2.msra.mxu0 0.0
    %121 = vmatprep.subr.mxu0 0.0
    %122 = vmatpush2.msra.mxu0 0.0
    %123 = vmatprep.subr.mxu0 0.0
    %124 = vmatpush2.msra.mxu0 0.0
    %125 = vmatprep.subr.mxu0 0.0
    %126 = vmatpush2.msra.mxu0 0.0
    %127 = vmatprep.subr.mxu0 0.0
    %128 = vmatpush2.msra.mxu0 0.0
    %129 = vmatprep.subr.mxu0 0.0
    %130 = vmatpush2.msra.mxu0 0.0
    %131 = vmatprep.subr.mxu0 0.0
    %132 = vmatpush2.msra.mxu0 0.0
    %133 = vmatprep.subr.mxu0 0.0
    %134 = vmatpush2.msra.mxu0 0.0
    %135 = vmatprep.subr.mxu0 0.0
    %136 = vmatpush2.msra.mxu0 0.0
    %137 = vmatprep.subr.mxu0 0.0
    %138 = vmatpush2.msra.mxu0 0.0
    %139 = vmatprep.subr.mxu0 0.0
    %140 = vmatpush2.msra.mxu0 0.0
    %141 = vmatprep.subr.mxu0 0.0
    %142 = vmatpush2.msra.mxu0 0.0
    %143 = vmatprep.mubr.f32.mxu0 0.0
    %144 = vmatmul.mubr.f32.gmra.mxu0 %v73
    %v145 = vpop.f32.mrf.mxu0
    %v146 = vadd.f32 %v70, %v145
    %v147 = vpop.f32.mrf.mxu0
    %148 = vdwg.mxu0
    %v149 = vld [vmem:[%s3] sm:$0x7]
    %v150 = vadd.f32 %v146, %v149
    %v151 = vld [vmem:[#allocation8] sm:$0x7]
    %v152 = vadd.f32 %v150, %v151
    %vm153 = vcmask 18432
    %154 = vst.msk [vmem:[#allocation10] sm:$0x7] %vm153, %v152
    // Predicated region
    $region38: #{fused_mm_add.1} parent=1 // pred_check
      _
    $region39: #{fused_mm_add.1} parent=1 // pred_check_branch
      %156 = sbr.rel (0) target = $region41
    $region40: #{fused_mm_add.1} parent=1 // pred_region
      %s158 = ssub.s32 64, 64
      %159 = vsyncadd [#allocation4], %s158
      %s161 = sshll.u32 [#allocation10], 4
      %s162 = int_to_ptr.vmem [resolvable:$true] %s161
      %164 = dma.vmem_to_hbm [thread:$0]  %s162, 64, %s5, [#allocation4]
    $region41: #{fused_mm_add.1} parent=1 // pred_fallthru
      _
    // Predicated region
    $region42: #{fused_mm_add.1} parent=1 // pred_check
      _
    $region43: #{fused_mm_add.1} parent=1 // pred_check_branch
      %166 = sbr.rel (0) target = $region45
    $region44: #{fused_mm_add.1} parent=1 // pred_region
      %167 = dma.done [#allocation4], 64
    $region45: #{fused_mm_add.1} parent=1 // pred_fallthru
      _
    %168 = vsyncpa [#allocation3], 1
    %169 = vsyncpa [#allocation6], 1
    %170 = vsyncpa [#allocation9], 1
    %171 = vsyncpa [#allocation4], 1

</llo_original>
